<compile_context>
chip_gen: v7x
topology: tpu7x:2x2x1
jax: 0.10.0
libtpu: 0.0.40
codegen_flags: <defaults>
</compile_context>

<pallas_src>
import jax
import jax.numpy as jnp
from jax.experimental import pallas as pl
from jax.experimental.pallas import tpu as pltpu

_LANE = 128
_SUBLANE = 16          # bf16 sublane packing -> batch tile multiple of 16


def _round_up(x, m):
    return (x + m - 1) // m * m


def _mlp_kernel(x_ref, w_ref, b_ref, o_ref):
    # MXU bf16 matmul with f32 accumulation; bias add on VPU in f32.
    y = jnp.dot(x_ref[...], w_ref[...], preferred_element_type=jnp.float32)
    y = y + b_ref[...]                                   # (TB, Np) + (1, Np), f32
    # sigmoid(y) = 0.5 * (tanh(y / 2) + 1): EUP tanh, numerically stable.
    o_ref[...] = (0.5 * (jnp.tanh(0.5 * y) + 1.0)).astype(o_ref.dtype)


def prepare_mlp_params(w, b):
    """One-time parameter prep: pad N -> multiple of 128 (lane-dense store),
    cast weight to bf16 for the MXU, reshape bias to (1, N_pad) f32.

    w: (C, N)  (transpose of PyTorch nn.Linear's (N, C) weight)
    b: (N,)
    """
    C, N = w.shape
    assert b.shape == (N,)
    N_pad = _round_up(N, _LANE)
    if N_pad != N:
        w = jnp.pad(w, ((0, 0), (0, N_pad - N)))
        b = jnp.pad(b, ((0, N_pad - N),))
    return w.astype(jnp.bfloat16), b.reshape(1, N_pad).astype(jnp.float32)


def mlp_forward(x, w_p, b_p, *, block_b=2048, out_dtype=jnp.float32):
    """Sigmoid(x @ w + b) with prepared params.

    x:   (B, C)   any float dtype (cast to bf16 for the MXU)
    w_p: (C, N_pad) bf16, b_p: (1, N_pad) f32   (from prepare_mlp_params)
    Returns the padded (B, N_pad) result; consumers index [:, :num_classes]
    (padded columns hold harmless sigmoid(0 + b_pad)=0.5 values).
    """
    B, C = x.shape
    Cw, N_pad = w_p.shape
    assert C == Cw and b_p.shape == (1, N_pad)

    if x.dtype != jnp.bfloat16:
        x = x.astype(jnp.bfloat16)          # halves the dominant HBM stream

    # Batch tile: as large as block_b allows (amortize per-step overhead),
    # multiple of 16 sublanes, but keep >= 2 grid steps when B allows so both
    # v7x TensorCores get tiles (neutral on single-TC v5e/v6e).
    TB = min(block_b, _round_up(B, _SUBLANE))
    if B > _SUBLANE and pl.cdiv(B, TB) < 2:
        TB = _round_up(pl.cdiv(B, 2), _SUBLANE)
    grid = (pl.cdiv(B, TB),)                # no batch padding: edge tile is masked

    flops = 2 * B * C * N_pad
    bytes_accessed = 2 * B * C + 2 * C * N_pad + 4 * N_pad + 4 * B * N_pad

    return pl.pallas_call(
        _mlp_kernel,
        out_shape=jax.ShapeDtypeStruct((B, N_pad), out_dtype),
        grid=grid,
        in_specs=[
            pl.BlockSpec((TB, C), lambda i: (i, 0)),       # batch-tiled activations
            pl.BlockSpec((C, N_pad), lambda i: (0, 0)),    # weight: VMEM-resident
            pl.BlockSpec((1, N_pad), lambda i: (0, 0)),    # bias:   VMEM-resident
        ],
        out_specs=pl.BlockSpec((TB, N_pad), lambda i: (i, 0)),
        compiler_params=pltpu.CompilerParams(
            dimension_semantics=("parallel",),             # shard batch tiles across TCs (v7x)
            vmem_limit_bytes=32 * 1024 * 1024,             # safe headroom incl. v5e
        ),
        cost_estimate=pl.CostEstimate(
            flops=flops,
            transcendentals=B * N_pad,
            bytes_accessed=bytes_accessed,
        ),
    )(x, w_p, b_p)


if __name__ == "__main__":
    key = jax.random.PRNGKey(0)
    k_x, k_w, k_b = jax.random.split(key, 3)

    batch = 512          # -> 2 batch tiles of 256 rows, exercises the pipeline
    in_channels = 32
    num_classes = 2

    # Shapes match nn.Linear(in_channels, num_classes); PyTorch stores weight
    # as (out, in), we store the transpose (in, out) so the kernel does x @ W.
    x = jax.random.normal(k_x, (batch, in_channels), dtype=jnp.float32)
    w = jax.random.normal(k_w, (in_channels, num_classes), dtype=jnp.float32) * 0.1
    b = jax.random.normal(k_b, (num_classes,), dtype=jnp.float32) * 0.1

    # One-time parameter prep (pad to lane width, cast to bf16).
    w_p, b_p = prepare_mlp_params(w, b)

    out_padded = jax.block_until_ready(mlp_forward(x, w_p, b_p))
    out = out_padded[:, :num_classes]        # consumer-side view of valid columns

    # Reference check in plain f32 JAX (same math as nn.Linear + Sigmoid).
    ref = jax.nn.sigmoid(x @ w + b[None, :])
    assert out.shape == (batch, num_classes)
    # bf16 MXU inputs with f32 accumulation: relaxed tolerance on sigmoid outputs.
    assert jnp.allclose(out, ref, atol=1e-2, rtol=1e-2)

    print("KERNEL_OK")
</pallas_src>

<mosaic_0001>
module attributes {stable_mosaic.version = 11 : i64} {
  func.func @_mlp_kernel(%arg0: i32, %arg1: memref<256x32xbf16, #tpu.memory_space<vmem>>, %arg2: memref<32x128xbf16, #tpu.memory_space<vmem>>, %arg3: memref<1x128xf32, #tpu.memory_space<vmem>>, %arg4: memref<256x128xf32, #tpu.memory_space<vmem>>) attributes {dimension_semantics = [#tpu.dimension_semantics<parallel>], iteration_bounds = array<i64: 2>, scalar_prefetch = 0 : i64, scratch_operands = 0 : i64, tpu.core_type = #tpu.core_type<tc>, window_params = [{transform_indices = @transform_0, window_bounds = array<i64: 256, 32>}, {pipeline_mode = #tpu.pipeline_mode<synchronous>, transform_indices = @transform_1, window_bounds = array<i64: 32, 128>}, {pipeline_mode = #tpu.pipeline_mode<synchronous>, transform_indices = @transform_2, window_bounds = array<i64: 1, 128>}, {transform_indices = @transform_3, window_bounds = array<i64: 256, 128>}]} {
    %c0 = arith.constant 0 : index
    %c0_0 = arith.constant 0 : index
    %0 = vector.load %arg1[%c0, %c0_0] : memref<256x32xbf16, #tpu.memory_space<vmem>>, vector<256x32xbf16>
    %c0_1 = arith.constant 0 : index
    %c0_2 = arith.constant 0 : index
    %1 = vector.load %arg2[%c0_1, %c0_2] : memref<32x128xbf16, #tpu.memory_space<vmem>>, vector<32x128xbf16>
    %cst = arith.constant dense<0.000000e+00> : vector<256x128xf32>
    %2 = tpu.matmul %0, %1, %cst {dimension_numbers = #tpu.dot_dimension_numbers<[1], [0], [0], [1], [0, 0, 1, 1], [], []>} : vector<256x32xbf16>, vector<32x128xbf16>, vector<256x128xf32> -> vector<256x128xf32>
    %c0_3 = arith.constant 0 : index
    %c0_4 = arith.constant 0 : index
    %3 = vector.load %arg3[%c0_3, %c0_4] : memref<1x128xf32, #tpu.memory_space<vmem>>, vector<1x128xf32>
    %4 = vector.broadcast %3 : vector<1x128xf32> to vector<256x128xf32>
    %5 = arith.addf %2, %4 : vector<256x128xf32>
    %cst_5 = arith.constant 5.000000e-01 : f32
    %6 = vector.broadcast %cst_5 : f32 to vector<256x128xf32>
    %7 = arith.mulf %6, %5 : vector<256x128xf32>
    %8 = math.tanh %7 : vector<256x128xf32>
    %cst_6 = arith.constant 1.000000e+00 : f32
    %9 = vector.broadcast %cst_6 : f32 to vector<256x128xf32>
    %10 = arith.addf %8, %9 : vector<256x128xf32>
    %cst_7 = arith.constant 5.000000e-01 : f32
    %11 = vector.broadcast %cst_7 : f32 to vector<256x128xf32>
    %12 = arith.mulf %11, %10 : vector<256x128xf32>
    %c0_8 = arith.constant 0 : index
    %c0_9 = arith.constant 0 : index
    %13 = vector.load %arg4[%c0_8, %c0_9] : memref<256x128xf32, #tpu.memory_space<vmem>>, vector<256x128xf32>
    tpu.vector_store %arg4[%c0_8, %c0_9], %12 {strides = array<i32>} : memref<256x128xf32, #tpu.memory_space<vmem>>, vector<256x128xf32>,
    return
  }
  func.func @transform_0(%arg0: i32) -> (i32, i32) {
    %c0_i32 = arith.constant 0 : i32
    %c0_i32_0 = arith.constant 0 : i32
    return %arg0, %c0_i32 : i32, i32
  }
  func.func @transform_1(%arg0: i32) -> (i32, i32) {
    %c0_i32 = arith.constant 0 : i32
    %c0_i32_0 = arith.constant 0 : i32
    %c0_i32_1 = arith.constant 0 : i32
    return %c0_i32, %c0_i32_0 : i32, i32
  }
  func.func @transform_2(%arg0: i32) -> (i32, i32) {
    %c0_i32 = arith.constant 0 : i32
    %c0_i32_0 = arith.constant 0 : i32
    %c0_i32_1 = arith.constant 0 : i32
    return %c0_i32, %c0_i32_0 : i32, i32
  }
  func.func @transform_3(%arg0: i32) -> (i32, i32) {
    %c0_i32 = arith.constant 0 : i32
    %c0_i32_0 = arith.constant 0 : i32
    return %arg0, %c0_i32 : i32, i32
  }
}

</mosaic_0001>

<llo_original>
// kernel: tpu_custom_call.1
$region0: #{tpu_custom_call.1}
  #allocation0 [shape = 'u32[]', space=smem, size = 0x4, offset = 0x4, fixed_abs, tag = 'smem constant byte address 0x4 - core index']
  #allocation1 [shape = 'u32[144,128]{1,0:T(1,128)}', space=vmem, size = 0x12000, scoped, tag = 'internal scratch']
  %s0 = inlined_call_operand.vmem [shape: bf16[512,32], index: 0, kind: input, shape index: {}]
  %s1 = inlined_call_operand.vmem [shape: bf16[32,128], index: 1, kind: input, shape index: {}]
  %s2 = inlined_call_operand.vmem [shape: f32[1,128], index: 2, kind: input, shape index: {}]
  %s3 = inlined_call_operand.hbm [shape: f32[512,128], index: 3, kind: output, shape index: {}]
  %s4 = sld [smem:[#allocation0]]
  $region45: #{tpu_custom_call.1} parent=0
    _
  %s6 = ssub.s32 1, %s4
  %s7 = scalar_select 0, %s6, %s4
  $region1: #{tpu_custom_call.1} parent=0
    #allocation2 [shape = 'u8[262144]{0}', space=vmem, size = 0x40000, scoped, tag = 'output window, operand 0']
    #allocation3 [shape = 's32[2]{0}', space=sflag, size = 0x8, scoped, tag = 'scoped memory for tpu_custom_call.1']
    %8 = vsyncpa [#allocation3], 0
    %s9 = scalar_lea.sflag [#allocation3], 1
    %10 = vsyncpa %s9, 0
    loop: start=0, step=1, limit=4
    $region2: #{tpu_custom_call.1} parent=1 // loop_pre_header
      _
    $region3: #{tpu_custom_call.1} parent=1 // loop_header
      %s12 = sphi 0, %s16
      %p13 = scmp.ge.s32.totalorder %s12, 4
      %s22 = sphi 0, %s24
      %s25 = sphi 0, %s22
      %s26 = sphi 0, %s25
      %s42 = sphi 0, %s26
      %s46 = sphi 0, %s46
      %s48 = sphi 0, %s46
      %s49 = sphi 0, %s48
      %s63 = sphi 0, %s49
      %s67 = sphi 0, %s67
      %s69 = sphi 0, %s67
      %s70 = sphi 0, %s69
      %s84 = sphi 0, %s70
      %s90 = sphi 0, %s92
      %s93 = sphi 0, %s90
      %s94 = sphi 0, %s93
      %s110 = sphi 0, %s94
    $region4: #{tpu_custom_call.1} parent=1 // loop_header_branch
      %15 = sbr.rel (%p13) target = $region8
    $region5: #{tpu_custom_call.1} parent=1 // loop_body
      %s17 = ssub.s32 %s12, 1
      %s18 = ssub.s32 %s12, 2
      %s19 = sadd.s32 %s12, 1
      %s20 = ssub.s32 %s12, %s19
      %p21 = scmp.eq.s32.totalorder %s20, 0
      %s23 = sadd.s32 %s22, 1
      %s24 = scalar_select %p21, %s22, %s23
      %p27 = pneg %p21
      %p28 = scmp.eq.s32.totalorder %s12, 1
      %p29 = por %p27, %p28
      %p30 = scmp.ne.s32.totalorder %s22, %s25
      %p31 = scmp.eq.s32.totalorder %s12, 0
      %p32 = por %p30, %p31
      %p33 = scmp.ne.s32.totalorder %s22, %s25
      %p34 = scmp.eq.s32.totalorder %s17, 1
      %p35 = por %p33, %p34
      %p36 = scmp.ne.s32.totalorder %s25, %s26
      %p37 = scmp.eq.s32.totalorder %s17, 0
      %p38 = por %p36, %p37
      %p39 = scmp.ne.s32.totalorder %s25, %s26
      %p40 = scmp.eq.s32.totalorder %s18, 1
      %p41 = por %p39, %p40
      %p43 = scmp.ne.s32.totalorder %s26, %s42
      %p44 = scmp.eq.s32.totalorder %s18, 0
      %p45 = por %p43, %p44
      %s47 = sadd.s32 %s46, 1
      %p50 = scmp.eq.s32.totalorder %s12, 1
      %p51 = scmp.ne.s32.totalorder %s46, %s48
      %p52 = scmp.eq.s32.totalorder %s12, 0
      %p53 = por %p51, %p52
      %p54 = scmp.ne.s32.totalorder %s46, %s48
      %p55 = scmp.eq.s32.totalorder %s17, 1
      %p56 = por %p54, %p55
      %p57 = scmp.ne.s32.totalorder %s48, %s49
      %p58 = scmp.eq.s32.totalorder %s17, 0
      %p59 = por %p57, %p58
      %p60 = scmp.ne.s32.totalorder %s48, %s49
      %p61 = scmp.eq.s32.totalorder %s18, 1
      %p62 = por %p60, %p61
      %p64 = scmp.ne.s32.totalorder %s49, %s63
      %p65 = scmp.eq.s32.totalorder %s18, 0
      %p66 = por %p64, %p65
      %s68 = sadd.s32 %s67, 1
      %p71 = scmp.eq.s32.totalorder %s12, 1
      %p72 = scmp.ne.s32.totalorder %s67, %s69
      %p73 = scmp.eq.s32.totalorder %s12, 0
      %p74 = por %p72, %p73
      %p75 = scmp.ne.s32.totalorder %s67, %s69
      %p76 = scmp.eq.s32.totalorder %s17, 1
      %p77 = por %p75, %p76
      %p78 = scmp.ne.s32.totalorder %s69, %s70
      %p79 = scmp.eq.s32.totalorder %s17, 0
      %p80 = por %p78, %p79
      %p81 = scmp.ne.s32.totalorder %s69, %s70
      %p82 = scmp.eq.s32.totalorder %s18, 1
      %p83 = por %p81, %p82
      %p85 = scmp.ne.s32.totalorder %s70, %s84
      %p86 = scmp.eq.s32.totalorder %s18, 0
      %p87 = por %p85, %p86
      %s88 = ssub.s32 %s12, %s19
      %p89 = scmp.eq.s32.totalorder %s88, 0
      %s91 = sadd.s32 %s90, 1
      %s92 = scalar_select %p89, %s90, %s91
      %p95 = pneg %p89
      %p96 = scmp.eq.s32.totalorder %s12, 1
      %p97 = por %p95, %p96
      %p98 = scmp.ne.s32.totalorder %s90, %s93
      %p99 = scmp.eq.s32.totalorder %s12, 0
      %p100 = por %p98, %p99
      %p101 = scmp.ne.s32.totalorder %s90, %s93
      %p102 = scmp.eq.s32.totalorder %s17, 1
      %p103 = por %p101, %p102
      %p104 = scmp.ne.s32.totalorder %s93, %s94
      %p105 = scmp.eq.s32.totalorder %s17, 0
      %p106 = por %p104, %p105
      %p107 = scmp.ne.s32.totalorder %s93, %s94
      %p108 = scmp.eq.s32.totalorder %s18, 1
      %p109 = por %p107, %p108
      %p111 = scmp.ne.s32.totalorder %s94, %s110
      %p112 = scmp.eq.s32.totalorder %s18, 0
      %p113 = por %p111, %p112
      %p114 = scmp.le.s32.totalorder 1, %s12
      %p115 = scmp.lt.s32.totalorder %s12, 3
      %p116 = pnand %p114, %p115
      %p117 = pneg %p116
      // Predicated region
      $region9: #{tpu_custom_call.1} parent=5 // pred_check
        _
      $region10: #{tpu_custom_call.1} parent=5 // pred_check_branch
        %119 = sbr.rel (%p116) target = $region12
      $region11: #{tpu_custom_call.1} parent=5 // pred_region
        %s120 = ssub.s32 %s12, 1
        // Predicated region
        $region13: #{tpu_custom_call.1} parent=11 // pred_check
          %p121 = pneg %p59
        $region14: #{tpu_custom_call.1} parent=11 // pred_check_branch
          %123 = sbr.rel (%p121) target = $region16
        $region15: #{tpu_custom_call.1} parent=11 // pred_region
          _
        $region16: #{tpu_custom_call.1} parent=11 // pred_fallthru
          _
        // Predicated region
        $region17: #{tpu_custom_call.1} parent=11 // pred_check
          %p124 = pneg %p80
        $region18: #{tpu_custom_call.1} parent=11 // pred_check_branch
          %126 = sbr.rel (%p124) target = $region20
        $region19: #{tpu_custom_call.1} parent=11 // pred_region
          _
        $region20: #{tpu_custom_call.1} parent=11 // pred_fallthru
          _
      $region12: #{tpu_custom_call.1} parent=5 // pred_fallthru
        _
      %p127 = scmp.lt.s32.totalorder %s12, 2
      // Predicated region
      $region21: #{tpu_custom_call.1} parent=5 // pred_check
        %p128 = pneg %p127
      $region22: #{tpu_custom_call.1} parent=5 // pred_check_branch
        %130 = sbr.rel (%p128) target = $region24
      $region23: #{tpu_custom_call.1} parent=5 // pred_region
        // Predicated region
        $region25: #{tpu_custom_call.1} parent=23 // pred_check
          %p131 = pneg %p32
        $region26: #{tpu_custom_call.1} parent=23 // pred_check_branch
          %133 = sbr.rel (%p131) target = $region28
        $region27: #{tpu_custom_call.1} parent=23 // pred_region
          %s134 = smul.u32 32, %s12
          %p135 = scmp.lt.s32.totalorder %s134, 63
          %s136 = scalar_select %p135, %s134, 63
          %s137 = smul.addr %s136, 4
          %s138 = scalar_lea.vmem %s0, %s137
          %s139 = smul.u32 32, %s12
        $region28: #{tpu_custom_call.1} parent=23 // pred_fallthru
          _
      $region24: #{tpu_custom_call.1} parent=5 // pred_fallthru
        _
      %p140 = scmp.le.s32.totalorder 1, %s12
      %p141 = scmp.lt.s32.totalorder %s12, 3
      %p142 = pnand %p140, %p141
      %p143 = pneg %p142
      // Predicated region
      $region29: #{tpu_custom_call.1} parent=5 // pred_check
        _
      $region30: #{tpu_custom_call.1} parent=5 // pred_check_branch
        %145 = sbr.rel (%p142) target = $region32
      $region31: #{tpu_custom_call.1} parent=5 // pred_region
        %s146 = ssub.s32 %s12, 1
        %s147 = smul.u32 32, %s17
        %p148 = scmp.lt.s32.totalorder %s147, 63
        %s149 = scalar_select %p148, %s147, 63
        %s150 = smul.addr %s149, 4
        %s151 = scalar_lea.vmem %s0, %s150
        %p152 = pneg %p38
        %p153 = pneg %p35
        %p154 = pneg %p59
        %p155 = pneg %p56
        %p156 = pneg %p80
        %p157 = pneg %p77
        %p158 = pneg %p106
        %p159 = pneg %p103
        %s160 = sand.u32 %s93, 1
        %s161 = scalar_lea.sflag [#allocation3], %s160
        %s162 = sand.u32 %s93, 1
        %s163 = smul.addr %s162, 256
        %s164 = scalar_lea.vmem [#allocation2], %s163
        %s165 = smul.u32 32, %s17
        %p166 = scmp.lt.s32.totalorder %s165, 63
        %s167 = scalar_select %p166, %s165, 63
        %s168 = smul.addr %s167, 4
        %s169 = scalar_lea.vmem %s0, %s168
        %s170 = smul.u32 32, %s17
        %s171 = smul.u32 32, %s17
        %v173 = vld [vmem:[%s169] sm:$0xf]
        %v174 = vld [vmem:[%s169 + $0x4] sm:$0xf]
        %v175 = vld [vmem:[%s169 + $0x8] sm:$0xf]
        %v176 = vld [vmem:[%s169 + $0xc] sm:$0xf]
        %v177 = vld [vmem:[%s169 + $0x10] sm:$0xf]
        %v178 = vld [vmem:[%s169 + $0x14] sm:$0xf]
        %v179 = vld [vmem:[%s169 + $0x18] sm:$0xf]
        %v180 = vld [vmem:[%s169 + $0x1c] sm:$0xf]
        %v181 = vld [vmem:[%s169 + $0x20] sm:$0xf]
        %v182 = vld [vmem:[%s169 + $0x24] sm:$0xf]
        %v183 = vld [vmem:[%s169 + $0x28] sm:$0xf]
        %v184 = vld [vmem:[%s169 + $0x2c] sm:$0xf]
        %v185 = vld [vmem:[%s169 + $0x30] sm:$0xf]
        %v186 = vld [vmem:[%s169 + $0x34] sm:$0xf]
        %v187 = vld [vmem:[%s169 + $0x38] sm:$0xf]
        %v188 = vld [vmem:[%s169 + $0x3c] sm:$0xf]
        %v189 = vld [vmem:[%s169 + $0x40] sm:$0xf]
        %v190 = vld [vmem:[%s169 + $0x44] sm:$0xf]
        %v191 = vld [vmem:[%s169 + $0x48] sm:$0xf]
        %v192 = vld [vmem:[%s169 + $0x4c] sm:$0xf]
        %v193 = vld [vmem:[%s169 + $0x50] sm:$0xf]
        %v194 = vld [vmem:[%s169 + $0x54] sm:$0xf]
        %v195 = vld [vmem:[%s169 + $0x58] sm:$0xf]
        %v196 = vld [vmem:[%s169 + $0x5c] sm:$0xf]
        %v197 = vld [vmem:[%s169 + $0x60] sm:$0xf]
        %v198 = vld [vmem:[%s169 + $0x64] sm:$0xf]
        %v199 = vld [vmem:[%s169 + $0x68] sm:$0xf]
        %v200 = vld [vmem:[%s169 + $0x6c] sm:$0xf]
        %v201 = vld [vmem:[%s169 + $0x70] sm:$0xf]
        %v202 = vld [vmem:[%s169 + $0x74] sm:$0xf]
        %v203 = vld [vmem:[%s169 + $0x78] sm:$0xf]
        %v204 = vld [vmem:[%s169 + $0x7c] sm:$0xf]
        %v205 = vld [vmem:[%s1] sm:$0xf]
        %v206 = vld [vmem:[%s1 + $0x4] sm:$0xf]
        %v207 = vld [vmem:[%s1 + $0x8] sm:$0xf]
        %v208 = vld [vmem:[%s1 + $0xc] sm:$0xf]
        %v209 = vld [vmem:[%s2] sm:$0x1]
        %v211 = vlaneseq
        %v212 = vshrl.u32 %v211, 7
        %v213 = vsub.s32 0, %v212
        %v214 = vrot.slane %v209, %v213
        %v248 = vunpack.c.l.b16 %v173
        %v249 = vunpack.c.l.b16 %v174
        %v250 = vunpack.c.l.b16 %v175
        %v251 = vunpack.c.l.b16 %v176
        %v252 = vunpack.c.l.b16 %v177
        %v253 = vunpack.c.l.b16 %v178
        %v254 = vunpack.c.l.b16 %v179
        %v255 = vunpack.c.l.b16 %v180
        %v256 = vunpack.c.l.b16 %v181
        %v257 = vunpack.c.l.b16 %v182
        %v258 = vunpack.c.l.b16 %v183
        %v259 = vunpack.c.l.b16 %v184
        %v260 = vunpack.c.l.b16 %v185
        %v261 = vunpack.c.l.b16 %v186
        %v262 = vunpack.c.l.b16 %v187
        %v263 = vunpack.c.l.b16 %v188
        %v264 = vunpack.c.l.b16 %v189
        %v265 = vunpack.c.l.b16 %v190
        %v266 = vunpack.c.l.b16 %v191
        %v267 = vunpack.c.l.b16 %v192
        %v268 = vunpack.c.l.b16 %v193
        %v269 = vunpack.c.l.b16 %v194
        %v270 = vunpack.c.l.b16 %v195
        %v271 = vunpack.c.l.b16 %v196
        %v272 = vunpack.c.l.b16 %v197
        %v273 = vunpack.c.l.b16 %v198
        %v274 = vunpack.c.l.b16 %v199
        %v275 = vunpack.c.l.b16 %v200
        %v276 = vunpack.c.l.b16 %v201
        %v277 = vunpack.c.l.b16 %v202
        %v278 = vunpack.c.l.b16 %v203
        %v279 = vunpack.c.l.b16 %v204
        %v280 = vpack.c.b16 %v249, %v248
        %v281 = vpack.c.b16 %v251, %v250
        %v282 = vpack.c.b16 %v253, %v252
        %v283 = vpack.c.b16 %v255, %v254
        %v284 = vpack.c.b16 %v257, %v256
        %v285 = vpack.c.b16 %v259, %v258
        %v286 = vpack.c.b16 %v261, %v260
        %v287 = vpack.c.b16 %v263, %v262
        %v288 = vpack.c.b16 %v265, %v264
        %v289 = vpack.c.b16 %v267, %v266
        %v290 = vpack.c.b16 %v269, %v268
        %v291 = vpack.c.b16 %v271, %v270
        %v292 = vpack.c.b16 %v273, %v272
        %v293 = vpack.c.b16 %v275, %v274
        %v294 = vpack.c.b16 %v277, %v276
        %v295 = vpack.c.b16 %v279, %v278
        %v300 = vunpack.c.l.b16 %v205
        %v301 = vunpack.c.l.b16 %v206
        %v302 = vunpack.c.l.b16 %v207
        %v303 = vunpack.c.l.b16 %v208
        %v304 = vpack.c.b16 %v301, %v300
        %v305 = vpack.c.b16 %v303, %v302
        %vm308 = vcmask 261120
        %v310 = vsel %vm308, %v280, 0
        %v313 = vsel %vm308, %v281, 0
        %v316 = vsel %vm308, %v282, 0
        %v319 = vsel %vm308, %v283, 0
        %v322 = vsel %vm308, %v284, 0
        %v325 = vsel %vm308, %v285, 0
        %v328 = vsel %vm308, %v286, 0
        %v331 = vsel %vm308, %v287, 0
        %v334 = vsel %vm308, %v288, 0
        %v337 = vsel %vm308, %v289, 0
        %v340 = vsel %vm308, %v290, 0
        %v343 = vsel %vm308, %v291, 0
        %v346 = vsel %vm308, %v292, 0
        %v349 = vsel %vm308, %v293, 0
        %v352 = vsel %vm308, %v294, 0
        %v355 = vsel %vm308, %v295, 0
        %357 = vmatprep.subr.bf16.mxu0 0
        %358 = vmatpush1.bf16.msra.mxu0 %v304
        %359 = vmatprep.subr.bf16.mxu0 0
        %360 = vmatpush1.bf16.msra.mxu0 %v305
        %361 = vmatprep.subr.bf16.mxu0 0
        %362 = vmatpush1.bf16.msra.mxu0 0
        %363 = vmatprep.subr.bf16.mxu0 0
        %364 = vmatpush1.bf16.msra.mxu0 0
        %365 = vmatprep.subr.bf16.mxu0 0
        %366 = vmatpush1.bf16.msra.mxu0 0
        %367 = vmatprep.subr.bf16.mxu0 0
        %368 = vmatpush1.bf16.msra.mxu0 0
        %369 = vmatprep.subr.bf16.mxu0 0
        %370 = vmatpush1.bf16.msra.mxu0 0
        %371 = vmatprep.subr.bf16.mxu0 0
        %372 = vmatpush1.bf16.msra.mxu0 0
        %373 = vmatprep.subr.bf16.mxu0 0
        %374 = vmatpush1.bf16.msra.mxu0 0
        %375 = vmatprep.subr.bf16.mxu0 0
        %376 = vmatpush1.bf16.msra.mxu0 0
        %377 = vmatprep.subr.bf16.mxu0 0
        %378 = vmatpush1.bf16.msra.mxu0 0
        %379 = vmatprep.subr.bf16.mxu0 0
        %380 = vmatpush1.bf16.msra.mxu0 0
        %381 = vmatprep.subr.bf16.mxu0 0
        %382 = vmatpush1.bf16.msra.mxu0 0
        %383 = vmatprep.subr.bf16.mxu0 0
        %384 = vmatpush1.bf16.msra.mxu0 0
        %385 = vmatprep.subr.bf16.mxu0 0
        %386 = vmatpush1.bf16.msra.mxu0 0
        %387 = vmatprep.subr.bf16.mxu0 0
        %388 = vmatpush1.bf16.msra.mxu0 0
        %389 = vmatprep.mubr.bf16.mxu0 0
        %390 = vmatmul.mubr.bf16.gmra.mrb[0].mxu0 %v310
        %v391 = vpop.f32.mrb[0].mxu0
        %v392 = vadd.f32 %v214, %v391
        %v393 = vpop.f32.mrb[0].mxu0
        %v394 = vpop.f32.mrb[0].mxu0
        %v395 = vadd.f32 %v214, %v394
        %v396 = vpop.f32.mrb[0].mxu0
        %397 = vmatprep.mubr.bf16.mxu0 0
        %398 = vmatmul.mubr.bf16.gmra.mrb[0].mxu0 %v313
        %v399 = vpop.f32.mrb[0].mxu0
        %v400 = vadd.f32 %v214, %v399
        %v401 = vpop.f32.mrb[0].mxu0
        %v402 = vpop.f32.mrb[0].mxu0
        %v403 = vadd.f32 %v214, %v402
        %v404 = vpop.f32.mrb[0].mxu0
        %405 = vmatprep.mubr.bf16.mxu0 0
        %406 = vmatmul.mubr.bf16.gmra.mrb[0].mxu0 %v316
        %v407 = vpop.f32.mrb[0].mxu0
        %v408 = vadd.f32 %v214, %v407
        %v409 = vpop.f32.mrb[0].mxu0
        %v410 = vpop.f32.mrb[0].mxu0
        %v411 = vadd.f32 %v214, %v410
        %v412 = vpop.f32.mrb[0].mxu0
        %413 = vmatprep.mubr.bf16.mxu0 0
        %414 = vmatmul.mubr.bf16.gmra.mrb[0].mxu0 %v319
        %v415 = vpop.f32.mrb[0].mxu0
        %v416 = vadd.f32 %v214, %v415
        %v417 = vpop.f32.mrb[0].mxu0
        %v418 = vpop.f32.mrb[0].mxu0
        %v419 = vadd.f32 %v214, %v418
        %v420 = vpop.f32.mrb[0].mxu0
        %421 = vmatprep.mubr.bf16.mxu0 0
        %422 = vmatmul.mubr.bf16.gmra.mrb[0].mxu0 %v322
        %v423 = vpop.f32.mrb[0].mxu0
        %v424 = vadd.f32 %v214, %v423
        %v425 = vpop.f32.mrb[0].mxu0
        %v426 = vpop.f32.mrb[0].mxu0
        %v427 = vadd.f32 %v214, %v426
        %v428 = vpop.f32.mrb[0].mxu0
        %429 = vmatprep.mubr.bf16.mxu0 0
        %430 = vmatmul.mubr.bf16.gmra.mrb[0].mxu0 %v325
        %v431 = vpop.f32.mrb[0].mxu0
        %v432 = vadd.f32 %v214, %v431
        %v433 = vpop.f32.mrb[0].mxu0
        %v434 = vpop.f32.mrb[0].mxu0
        %v435 = vadd.f32 %v214, %v434
        %v436 = vpop.f32.mrb[0].mxu0
        %437 = vmatprep.mubr.bf16.mxu0 0
        %438 = vmatmul.mubr.bf16.gmra.mrb[0].mxu0 %v328
        %v439 = vpop.f32.mrb[0].mxu0
        %v440 = vadd.f32 %v214, %v439
        %v441 = vpop.f32.mrb[0].mxu0
        %v442 = vpop.f32.mrb[0].mxu0
        %v443 = vadd.f32 %v214, %v442
        %v444 = vpop.f32.mrb[0].mxu0
        %445 = vmatprep.mubr.bf16.mxu0 0
        %446 = vmatmul.mubr.bf16.gmra.mrb[0].mxu0 %v331
        %v447 = vpop.f32.mrb[0].mxu0
        %v448 = vadd.f32 %v214, %v447
        %v449 = vpop.f32.mrb[0].mxu0
        %v450 = vpop.f32.mrb[0].mxu0
        %v451 = vadd.f32 %v214, %v450
        %v452 = vpop.f32.mrb[0].mxu0
        %453 = vmatprep.mubr.bf16.mxu0 0
        %454 = vmatmul.mubr.bf16.gmra.mrb[0].mxu0 %v334
        %v455 = vpop.f32.mrb[0].mxu0
        %v456 = vadd.f32 %v214, %v455
        %v457 = vpop.f32.mrb[0].mxu0
        %v458 = vpop.f32.mrb[0].mxu0
        %v459 = vadd.f32 %v214, %v458
        %v460 = vpop.f32.mrb[0].mxu0
        %461 = vmatprep.mubr.bf16.mxu0 0
        %462 = vmatmul.mubr.bf16.gmra.mrb[0].mxu0 %v337
        %v463 = vpop.f32.mrb[0].mxu0
        %v464 = vadd.f32 %v214, %v463
        %v465 = vpop.f32.mrb[0].mxu0
        %v466 = vpop.f32.mrb[0].mxu0
        %v467 = vadd.f32 %v214, %v466
        %v468 = vpop.f32.mrb[0].mxu0
        %469 = vmatprep.mubr.bf16.mxu0 0
        %470 = vmatmul.mubr.bf16.gmra.mrb[0].mxu0 %v340
        %v471 = vpop.f32.mrb[0].mxu0
        %v472 = vadd.f32 %v214, %v471
        %v473 = vpop.f32.mrb[0].mxu0
        %v474 = vpop.f32.mrb[0].mxu0
        %v475 = vadd.f32 %v214, %v474
        %v476 = vpop.f32.mrb[0].mxu0
        %477 = vmatprep.mubr.bf16.mxu0 0
        %478 = vmatmul.mubr.bf16.gmra.mrb[0].mxu0 %v343
        %v479 = vpop.f32.mrb[0].mxu0
        %v480 = vadd.f32 %v214, %v479
        %v481 = vpop.f32.mrb[0].mxu0
        %v482 = vpop.f32.mrb[0].mxu0
        %v483 = vadd.f32 %v214, %v482
        %v484 = vpop.f32.mrb[0].mxu0
        %485 = vmatprep.mubr.bf16.mxu0 0
        %486 = vmatmul.mubr.bf16.gmra.mrb[0].mxu0 %v346
        %v487 = vpop.f32.mrb[0].mxu0
        %v488 = vadd.f32 %v214, %v487
        %v489 = vpop.f32.mrb[0].mxu0
        %v490 = vpop.f32.mrb[0].mxu0
        %v491 = vadd.f32 %v214, %v490
        %v492 = vpop.f32.mrb[0].mxu0
        %493 = vmatprep.mubr.bf16.mxu0 0
        %494 = vmatmul.mubr.bf16.gmra.mrb[0].mxu0 %v349
        %v495 = vpop.f32.mrb[0].mxu0
        %v496 = vadd.f32 %v214, %v495
        %v497 = vpop.f32.mrb[0].mxu0
        %v498 = vpop.f32.mrb[0].mxu0
        %v499 = vadd.f32 %v214, %v498
        %v500 = vpop.f32.mrb[0].mxu0
        %501 = vmatprep.mubr.bf16.mxu0 0
        %502 = vmatmul.mubr.bf16.gmra.mrb[0].mxu0 %v352
        %v503 = vpop.f32.mrb[0].mxu0
        %v504 = vadd.f32 %v214, %v503
        %v505 = vpop.f32.mrb[0].mxu0
        %v506 = vpop.f32.mrb[0].mxu0
        %v507 = vadd.f32 %v214, %v506
        %v508 = vpop.f32.mrb[0].mxu0
        %509 = vmatprep.mubr.bf16.mxu0 0
        %510 = vmatmul.mubr.bf16.gmra.mrb[0].mxu0 %v355
        %v511 = vpop.f32.mrb[0].mxu0
        %v512 = vadd.f32 %v214, %v511
        %v513 = vpop.f32.mrb[0].mxu0
        %v514 = vpop.f32.mrb[0].mxu0
        %v515 = vadd.f32 %v214, %v514
        %v516 = vpop.f32.mrb[0].mxu0
        %517 = vdwg.mxu0
        %v518 = vmul.f32 %v392, 0.5
        %v519 = vmul.f32 %v395, 0.5
        %v520 = vmul.f32 %v400, 0.5
        %v521 = vmul.f32 %v403, 0.5
        %v522 = vmul.f32 %v408, 0.5
        %v523 = vmul.f32 %v411, 0.5
        %v524 = vmul.f32 %v416, 0.5
        %v525 = vmul.f32 %v419, 0.5
        %v526 = vmul.f32 %v424, 0.5
        %v527 = vmul.f32 %v427, 0.5
        %v528 = vmul.f32 %v432, 0.5
        %v529 = vmul.f32 %v435, 0.5
        %v530 = vmul.f32 %v440, 0.5
        %v531 = vmul.f32 %v443, 0.5
        %v532 = vmul.f32 %v448, 0.5
        %v533 = vmul.f32 %v451, 0.5
        %v534 = vmul.f32 %v456, 0.5
        %v535 = vmul.f32 %v459, 0.5
        %v536 = vmul.f32 %v464, 0.5
        %v537 = vmul.f32 %v467, 0.5
        %v538 = vmul.f32 %v472, 0.5
        %v539 = vmul.f32 %v475, 0.5
        %v540 = vmul.f32 %v480, 0.5
        %v541 = vmul.f32 %v483, 0.5
        %v542 = vmul.f32 %v488, 0.5
        %v543 = vmul.f32 %v491, 0.5
        %v544 = vmul.f32 %v496, 0.5
        %v545 = vmul.f32 %v499, 0.5
        %v546 = vmul.f32 %v504, 0.5
        %v547 = vmul.f32 %v507, 0.5
        %v548 = vmul.f32 %v512, 0.5
        %v549 = vmul.f32 %v515, 0.5
        %v550 = vtanh.pop %v518
        %v551 = vtanh.pop %v519
        %v552 = vtanh.pop %v520
        %v553 = vtanh.pop %v521
        %v554 = vtanh.pop %v522
        %v555 = vtanh.pop %v523
        %v556 = vtanh.pop %v524
        %v557 = vtanh.pop %v525
        %v558 = vtanh.pop %v526
        %v559 = vtanh.pop %v527
        %v560 = vtanh.pop %v528
        %v561 = vtanh.pop %v529
        %v562 = vtanh.pop %v530
        %v563 = vtanh.pop %v531
        %v564 = vtanh.pop %v532
        %v565 = vtanh.pop %v533
        %v566 = vtanh.pop %v534
        %v567 = vtanh.pop %v535
        %v568 = vtanh.pop %v536
        %v569 = vtanh.pop %v537
        %v570 = vtanh.pop %v538
        %v571 = vtanh.pop %v539
        %v572 = vtanh.pop %v540
        %v573 = vtanh.pop %v541
        %v574 = vtanh.pop %v542
        %v575 = vtanh.pop %v543
        %v576 = vtanh.pop %v544
        %v577 = vtanh.pop %v545
        %v578 = vtanh.pop %v546
        %v579 = vtanh.pop %v547
        %v580 = vtanh.pop %v548
        %v581 = vtanh.pop %v549
        %v582 = vadd.f32 %v550, 1.0
        %v583 = vadd.f32 %v551, 1.0
        %v584 = vadd.f32 %v552, 1.0
        %v585 = vadd.f32 %v553, 1.0
        %v586 = vadd.f32 %v554, 1.0
        %v587 = vadd.f32 %v555, 1.0
        %v588 = vadd.f32 %v556, 1.0
        %v589 = vadd.f32 %v557, 1.0
        %v590 = vadd.f32 %v558, 1.0
        %v591 = vadd.f32 %v559, 1.0
        %v592 = vadd.f32 %v560, 1.0
        %v593 = vadd.f32 %v561, 1.0
        %v594 = vadd.f32 %v562, 1.0
        %v595 = vadd.f32 %v563, 1.0
        %v596 = vadd.f32 %v564, 1.0
        %v597 = vadd.f32 %v565, 1.0
        %v598 = vadd.f32 %v566, 1.0
        %v599 = vadd.f32 %v567, 1.0
        %v600 = vadd.f32 %v568, 1.0
        %v601 = vadd.f32 %v569, 1.0
        %v602 = vadd.f32 %v570, 1.0
        %v603 = vadd.f32 %v571, 1.0
        %v604 = vadd.f32 %v572, 1.0
        %v605 = vadd.f32 %v573, 1.0
        %v606 = vadd.f32 %v574, 1.0
        %v607 = vadd.f32 %v575, 1.0
        %v608 = vadd.f32 %v576, 1.0
        %v609 = vadd.f32 %v577, 1.0
        %v610 = vadd.f32 %v578, 1.0
        %v611 = vadd.f32 %v579, 1.0
        %v612 = vadd.f32 %v580, 1.0
        %v613 = vadd.f32 %v581, 1.0
        %v614 = vmul.f32 %v582, 0.5
        %v615 = vmul.f32 %v583, 0.5
        %v616 = vmul.f32 %v584, 0.5
        %v617 = vmul.f32 %v585, 0.5
        %v618 = vmul.f32 %v586, 0.5
        %v619 = vmul.f32 %v587, 0.5
        %v620 = vmul.f32 %v588, 0.5
        %v621 = vmul.f32 %v589, 0.5
        %v622 = vmul.f32 %v590, 0.5
        %v623 = vmul.f32 %v591, 0.5
        %v624 = vmul.f32 %v592, 0.5
        %v625 = vmul.f32 %v593, 0.5
        %v626 = vmul.f32 %v594, 0.5
        %v627 = vmul.f32 %v595, 0.5
        %v628 = vmul.f32 %v596, 0.5
        %v629 = vmul.f32 %v597, 0.5
        %v630 = vmul.f32 %v598, 0.5
        %v631 = vmul.f32 %v599, 0.5
        %v632 = vmul.f32 %v600, 0.5
        %v633 = vmul.f32 %v601, 0.5
        %v634 = vmul.f32 %v602, 0.5
        %v635 = vmul.f32 %v603, 0.5
        %v636 = vmul.f32 %v604, 0.5
        %v637 = vmul.f32 %v605, 0.5
        %v638 = vmul.f32 %v606, 0.5
        %v639 = vmul.f32 %v607, 0.5
        %v640 = vmul.f32 %v608, 0.5
        %v641 = vmul.f32 %v609, 0.5
        %v642 = vmul.f32 %v610, 0.5
        %v643 = vmul.f32 %v611, 0.5
        %v644 = vmul.f32 %v612, 0.5
        %v645 = vmul.f32 %v613, 0.5
        %646 = vst [vmem:[%s164] sm:$0xff] %v614
        %647 = vst [vmem:[%s164 + $0x8] sm:$0xff] %v615
        %648 = vst [vmem:[%s164 + $0x10] sm:$0xff] %v616
        %649 = vst [vmem:[%s164 + $0x18] sm:$0xff] %v617
        %650 = vst [vmem:[%s164 + $0x20] sm:$0xff] %v618
        %651 = vst [vmem:[%s164 + $0x28] sm:$0xff] %v619
        %652 = vst [vmem:[%s164 + $0x30] sm:$0xff] %v620
        %653 = vst [vmem:[%s164 + $0x38] sm:$0xff] %v621
        %654 = vst [vmem:[%s164 + $0x40] sm:$0xff] %v622
        %655 = vst [vmem:[%s164 + $0x48] sm:$0xff] %v623
        %656 = vst [vmem:[%s164 + $0x50] sm:$0xff] %v624
        %657 = vst [vmem:[%s164 + $0x58] sm:$0xff] %v625
        %658 = vst [vmem:[%s164 + $0x60] sm:$0xff] %v626
        %659 = vst [vmem:[%s164 + $0x68] sm:$0xff] %v627
        %660 = vst [vmem:[%s164 + $0x70] sm:$0xff] %v628
        %661 = vst [vmem:[%s164 + $0x78] sm:$0xff] %v629
        %662 = vst [vmem:[%s164 + $0x80] sm:$0xff] %v630
        %663 = vst [vmem:[%s164 + $0x88] sm:$0xff] %v631
        %664 = vst [vmem:[%s164 + $0x90] sm:$0xff] %v632
        %665 = vst [vmem:[%s164 + $0x98] sm:$0xff] %v633
        %666 = vst [vmem:[%s164 + $0xa0] sm:$0xff] %v634
        %667 = vst [vmem:[%s164 + $0xa8] sm:$0xff] %v635
        %668 = vst [vmem:[%s164 + $0xb0] sm:$0xff] %v636
        %669 = vst [vmem:[%s164 + $0xb8] sm:$0xff] %v637
        %670 = vst [vmem:[%s164 + $0xc0] sm:$0xff] %v638
        %671 = vst [vmem:[%s164 + $0xc8] sm:$0xff] %v639
        %672 = vst [vmem:[%s164 + $0xd0] sm:$0xff] %v640
        %673 = vst [vmem:[%s164 + $0xd8] sm:$0xff] %v641
        %674 = vst [vmem:[%s164 + $0xe0] sm:$0xff] %v642
        %675 = vst [vmem:[%s164 + $0xe8] sm:$0xff] %v643
        %676 = vst [vmem:[%s164 + $0xf0] sm:$0xff] %v644
        %677 = vst [vmem:[%s164 + $0xf8] sm:$0xff] %v645
        %s678 = sand.u32 %s93, 1
        %s679 = scalar_lea.sflag [#allocation3], %s678
        %s680 = sand.u32 %s93, 1
        %s681 = smul.addr %s680, 256
        %s682 = scalar_lea.vmem [#allocation2], %s681
        // Predicated region
        $region33: #{tpu_custom_call.1} parent=31 // pred_check
          %p683 = pneg %p103
        $region34: #{tpu_custom_call.1} parent=31 // pred_check_branch
          %685 = sbr.rel (%p683) target = $region36
        $region35: #{tpu_custom_call.1} parent=31 // pred_region
          %s686 = smul.u32 32, %s17
          %s688 = ssub.s32 4096, 4096
          %689 = vsyncadd %s679, %s688
          %s690 = smul.addr %s686, 128
          %s691 = scalar_lea.hbm %s3, %s690
          %s692 = sshll.u32 %s682, 4
          %s693 = int_to_ptr.vmem [resolvable:$true] %s692
          %698 = dma.vmem_to_hbm [thread:$0]  %s693, 4096, %s691, %s679, 128, 128, 8
        $region36: #{tpu_custom_call.1} parent=31 // pred_fallthru
          _
      $region32: #{tpu_custom_call.1} parent=5 // pred_fallthru
        _
      %p699 = scmp.le.s32.totalorder 2, %s12
      // Predicated region
      $region37: #{tpu_custom_call.1} parent=5 // pred_check
        %p700 = pneg %p699
      $region38: #{tpu_custom_call.1} parent=5 // pred_check_branch
        %702 = sbr.rel (%p700) target = $region40
      $region39: #{tpu_custom_call.1} parent=5 // pred_region
        %s703 = ssub.s32 %s12, 2
        // Predicated region
        $region41: #{tpu_custom_call.1} parent=39 // pred_check
          %p704 = pneg %p109
        $region42: #{tpu_custom_call.1} parent=39 // pred_check_branch
          %706 = sbr.rel (%p704) target = $region44
        $region43: #{tpu_custom_call.1} parent=39 // pred_region
          %s707 = sand.u32 %s94, 1
          %s708 = scalar_lea.sflag [#allocation3], %s707
          %s709 = sand.u32 %s94, 1
          %s710 = smul.addr %s709, 256
          %s711 = scalar_lea.vmem [#allocation2], %s710
          %712 = dma.done %s708, 4096
        $region44: #{tpu_custom_call.1} parent=39 // pred_fallthru
          _
      $region40: #{tpu_custom_call.1} parent=5 // pred_fallthru
        _
    $region6: #{tpu_custom_call.1} parent=1 // loop_footer
      %s16 = sadd.s32 1, %s12
    $region7: #{tpu_custom_call.1} parent=1 // loop_footer_branch
      %11 = sbr.rel target = $region3
    $region8: #{tpu_custom_call.1} parent=1 // loop_exit
      _
    %713 = vsyncpa [#allocation3], 1
    %s714 = scalar_lea.sflag [#allocation3], 1
    %715 = vsyncpa %s714, 1

</llo_original>
